<compile_context>
chip_gen: v7x
topology: tpu7x:2x2x1
jax: 0.10.0
libtpu: 0.0.40
codegen_flags: <defaults>
</compile_context>

<pallas_src>
import functools
import math

import jax
import jax.numpy as jnp
from jax import lax
from jax.experimental import pallas as pl
from jax.experimental.pallas import tpu as pltpu

LANE = 128
SUB = 8


def _round_up(x, m):
    return ((x + m - 1) // m) * m


def _cdiv(a, b):
    return (a + b - 1) // b


def _gcn_kernel(adj_ref, h_left_ref, bias_ref, *rest, activation, nk, rem_k,
                TK, length, Lpad, Fpad, h_resident, has_passthrough):
    """acc += adj_tile @ h_left_tile; on last k: fuse bias+activation+merge."""
    if has_passthrough:
        h_full_ref, out_ref, acc_ref = rest
    else:
        out_ref, acc_ref = rest

    k = pl.program_id(2)

    @pl.when(k == 0)
    def _():
        acc_ref[...] = jnp.zeros_like(acc_ref)

    if h_resident:
        start = pl.multiple_of(k * TK, TK)
        h_blk = h_left_ref[0, pl.ds(start, TK), :]
    else:
        h_blk = h_left_ref[0]

    if rem_k == TK:
        # Reduction extent divides N: every adj block is fully in-bounds.
        acc_ref[...] += jnp.dot(adj_ref[0], h_blk,
                                preferred_element_type=jnp.float32)
    else:
        @pl.when(k != nk - 1)
        def _():
            acc_ref[...] += jnp.dot(adj_ref[0], h_blk,
                                    preferred_element_type=jnp.float32)

        @pl.when(k == nk - 1)
        def _():
            # Partial last adj block: contents beyond column rem_k are
            # unspecified -> mask them to exact zeros before the MXU.
            a = adj_ref[0]
            col = lax.broadcasted_iota(jnp.int32, a.shape, 1)
            a = jnp.where(col < rem_k, a, jnp.zeros_like(a))
            acc_ref[...] += jnp.dot(a, h_blk,
                                    preferred_element_type=jnp.float32)

    @pl.when(k == nk - 1)
    def _():
        left = activation(acc_ref[...] + bias_ref[...])          # (TM, Lpad) f32
        if has_passthrough:
            # Fused epilogue: merge matmul columns [0, length) with the
            # activated passthrough columns [length, Fout) in-kernel.
            pass_lo = activation(h_full_ref[0, :, :Lpad].astype(jnp.float32))
            col = lax.broadcasted_iota(jnp.int32, left.shape, 1)
            out_ref[0, :, :Lpad] = jnp.where(col < length, left,
                                             pass_lo).astype(out_ref.dtype)
            if Lpad < Fpad:
                out_ref[0, :, Lpad:] = activation(
                    h_full_ref[0, :, Lpad:].astype(jnp.float32)
                ).astype(out_ref.dtype)
        else:
            out_ref[0] = left.astype(out_ref.dtype)


def gcn_layer(features, adj, weight, bias, *, cut=0.33, do_cut=True,
              activation=jax.nn.relu, row_tile=512, k_tile=1024,
              matmul_dtype=jnp.bfloat16,
              resident_h_limit_bytes=8 * 1024 * 1024):
    """Pallas implementation of GCN_layer.forward."""
    B, N, Fin = features.shape
    Fout = weight.shape[-1]
    assert weight.shape[-2] == Fin

    length = int(round(Fout * cut)) if do_cut else Fout

    # ---- 1) Feature transform: one hoisted XLA matmul (tiny K). ----
    w2 = weight.reshape(Fin, Fout)
    h = (features.reshape(B * N, Fin) @ w2).reshape(B, N, Fout)

    if length == 0:
        # Degenerate cut: no graph propagation at all.
        return activation(h).astype(features.dtype)

    # ---- 2) Tile selection (no adj padding: partial blocks + in-kernel mask). ----
    row_tile = max(SUB, (row_tile // SUB) * SUB)
    k_tile = max(LANE, (k_tile // LANE) * LANE)
    TM = N if N <= row_tile else row_tile
    TK = N if N <= k_tile else k_tile
    # Keep >= 2 programs on the parallel axes so v7x's two TensorCores split work.
    if B * _cdiv(N, TM) < 2 and N > SUB:
        TM = _round_up(_cdiv(N, 2), SUB)

    nm = _cdiv(N, TM)
    nk = _cdiv(N, TK)
    Np_k = nk * TK
    rem_k = N - (nk - 1) * TK             # valid cols in last adj k-block

    Lpad = _round_up(length, LANE)        # lane-dense matmul / left columns
    Fpad = _round_up(Fout, LANE)          # lane-dense full-width output
    has_passthrough = length < Fout

    # ---- 3) Operands.  Only h-sized arrays are padded (cheap); adj is not. ----
    adj_in = adj.astype(matmul_dtype)
    h_left = jnp.pad(h[:, :, :length],
                     ((0, 0), (0, Np_k - N), (0, Lpad - length))
                     ).astype(matmul_dtype)
    bias_p = jnp.pad(bias[:length].astype(jnp.float32),
                     (0, Lpad - length)).reshape(1, Lpad)

    mm_itemsize = jnp.dtype(matmul_dtype).itemsize
    h_itemsize = jnp.dtype(h.dtype).itemsize
    out_itemsize = jnp.dtype(features.dtype).itemsize

    # h_left resident per batch (fetched once/batch) unless too large.
    h_resident = 2 * Np_k * Lpad * mm_itemsize <= resident_h_limit_bytes
    if h_resident:
        h_spec = pl.BlockSpec((1, Np_k, Lpad), lambda b, i, k: (b, 0, 0))
    else:
        h_spec = pl.BlockSpec((1, TK, Lpad), lambda b, i, k: (b, k, 0))

    in_specs = [
        pl.BlockSpec((1, TM, TK), lambda b, i, k: (b, i, k)),    # adj tile
        h_spec,                                                  # h_left
        pl.BlockSpec((1, Lpad), lambda b, i, k: (0, 0)),         # bias (shared)
    ]
    operands = [adj_in, h_left, bias_p]
    if has_passthrough:
        h_full = h if Fpad == Fout else jnp.pad(
            h, ((0, 0), (0, 0), (0, Fpad - Fout)))
        in_specs.append(pl.BlockSpec((1, TM, Fpad), lambda b, i, k: (b, i, 0)))
        operands.append(h_full)

    kernel = functools.partial(
        _gcn_kernel, activation=activation, nk=nk, rem_k=rem_k, TK=TK,
        length=length, Lpad=Lpad, Fpad=Fpad, h_resident=h_resident,
        has_passthrough=has_passthrough)

    # Explicit VMEM budget: double-buffered blocks + accumulator (+50% headroom),
    # capped at v7x's 64 MiB physical per-TC VMEM.
    vmem_bytes = (
        2 * TM * TK * mm_itemsize
        + (2 * Np_k * Lpad * mm_itemsize if h_resident
           else 2 * TK * Lpad * mm_itemsize)
        + 2 * Lpad * 4
        + (2 * TM * Fpad * h_itemsize if has_passthrough else 0)
        + 2 * TM * Fpad * out_itemsize
        + TM * Lpad * 4
    )
    vmem_limit = int(min(64 * 1024 * 1024,
                         max(16 * 1024 * 1024, 1.5 * vmem_bytes)))

    h_reads = (B * Np_k * Lpad) if h_resident else (B * nm * Np_k * Lpad)
    cost = pl.CostEstimate(
        flops=2 * B * N * N * Lpad,
        transcendentals=0,
        bytes_accessed=(B * N * N * mm_itemsize
                        + h_reads * mm_itemsize
                        + (B * N * Fpad * h_itemsize if has_passthrough else 0)
                        + B * N * Fpad * out_itemsize
                        + Lpad * 4),
    )

    out_p = pl.pallas_call(
        kernel,
        out_shape=jax.ShapeDtypeStruct((B, N, Fpad), features.dtype),
        grid=(B, nm, nk),
        in_specs=in_specs,
        out_specs=pl.BlockSpec((1, TM, Fpad), lambda b, i, k: (b, i, 0)),
        scratch_shapes=[pltpu.VMEM((TM, Lpad), jnp.float32)],
        compiler_params=pltpu.CompilerParams(
            dimension_semantics=("parallel", "parallel", "arbitrary"),
            vmem_limit_bytes=vmem_limit),
        cost_estimate=cost,
    )(*operands)

    # Single cheap slice (only if Fout is not already lane-aligned).
    return out_p if Fpad == Fout else out_p[:, :, :Fout]


def _reference(features, adj, weight, bias, *, cut=0.33, do_cut=True,
               activation=jax.nn.relu):
    """Plain-JAX reference mirroring the PyTorch forward exactly."""
    h = jnp.matmul(features, weight)          # broadcast (1,Fin,Fout) over batch
    if do_cut:
        length = int(round(h.shape[-1] * cut))
        left = jnp.matmul(adj, h[:, :, :length]) + bias[:length]
        right = h[:, :, length:]
        out = jnp.concatenate([left, right], axis=-1)
    else:
        out = jnp.matmul(adj, h) + bias
    return activation(out)


if __name__ == "__main__":
    key = jax.random.PRNGKey(0)
    k_f1, k_a1, k_f2, k_a2, k_w1, k_b1, k_w2, k_b2 = jax.random.split(key, 8)

    in_features = 4
    cut = 0.33

    def make_params(kw, kb, fout):
        stdv = 6.0 / math.sqrt(in_features + 1) * 0.3
        w = jax.random.uniform(kw, (1, in_features, fout), jnp.float32, -stdv, stdv)
        b = jax.random.uniform(kb, (fout,), jnp.float32, -0.05, 0.05)
        return w, b

    def make_inputs(kf, ka, B, N):
        feats = jax.random.normal(kf, (B, N, in_features), jnp.float32)
        adj_raw = jax.random.uniform(ka, (B, N, N), jnp.float32)
        adjm = adj_raw / jnp.sum(adj_raw, axis=-1, keepdims=True)
        return feats, adjm

    w32, b32 = make_params(k_w1, k_b1, 32)
    w256, b256 = make_params(k_w2, k_b2, 256)

    feats_s, adj_s = make_inputs(k_f1, k_a1, 2, 8)      # small module-like shape
    feats_l, adj_l = make_inputs(k_f2, k_a2, 2, 200)    # non-aligned N -> partial
                                                        # blocks + masked k block

    checks = [
        # (features, adj, weight, bias, do_cut, extra kwargs, tolerance)
        (feats_s, adj_s, w32, b32, True, dict(), 5e-2),                      # bf16
        (feats_s, adj_s, w32, b32, False, dict(), 5e-2),                     # no-cut
        (feats_s, adj_s, w32, b32, True, dict(matmul_dtype=jnp.float32), 1e-5),
        (feats_l, adj_l, w32, b32, True, dict(row_tile=64, k_tile=128), 5e-2),
        (feats_s, adj_s, w256, b256, True, dict(), 5e-2),                    # Lpad<Fpad
    ]
    for feats, adjm, w, b, do_cut, kw, tol in checks:
        out = gcn_layer(feats, adjm, w, b, cut=cut, do_cut=do_cut,
                        activation=jax.nn.relu, **kw)
        out = jax.block_until_ready(out)
        ref = _reference(feats, adjm, w, b, cut=cut, do_cut=do_cut,
                         activation=jax.nn.relu)
        assert out.shape == ref.shape, (out.shape, ref.shape)
        err = float(jnp.max(jnp.abs(out - ref)))
        assert jnp.allclose(out, ref, atol=tol, rtol=tol), \
            f"mismatch do_cut={do_cut} kw={kw} max_abs_err={err}"

    print("KERNEL_OK")
</pallas_src>

<mosaic_0001>
module attributes {stable_mosaic.version = 11 : i64} {
  func.func @_gcn_kernel(%arg0: i32, %arg1: i32, %arg2: i32, %arg3: memref<1x8x8xbf16, #tpu.memory_space<vmem>>, %arg4: memref<1x8x128xbf16, #tpu.memory_space<vmem>>, %arg5: memref<1x128xf32, #tpu.memory_space<vmem>>, %arg6: memref<1x8x128xf32, #tpu.memory_space<vmem>>, %arg7: memref<1x8x128xf32, #tpu.memory_space<vmem>>, %arg8: memref<8x128xf32, #tpu.memory_space<vmem>>) attributes {dimension_semantics = [#tpu.dimension_semantics<parallel>, #tpu.dimension_semantics<parallel>, #tpu.dimension_semantics<arbitrary>], iteration_bounds = array<i64: 2, 1, 1>, scalar_prefetch = 0 : i64, scratch_operands = 1 : i64, tpu.core_type = #tpu.core_type<tc>, window_params = [{transform_indices = @transform_0, window_bounds = array<i64: 1, 8, 8>}, {transform_indices = @transform_1, window_bounds = array<i64: 1, 8, 128>}, {pipeline_mode = #tpu.pipeline_mode<synchronous>, transform_indices = @transform_2, window_bounds = array<i64: 1, 128>}, {transform_indices = @transform_3, window_bounds = array<i64: 1, 8, 128>}, {transform_indices = @transform_4, window_bounds = array<i64: 1, 8, 128>}]} {
    %c0_i32 = arith.constant 0 : i32
    %0 = arith.cmpi eq, %arg2, %c0_i32 : i32
    %1 = arith.extui %0 : i1 to i32
    %c0_i32_0 = arith.constant 0 : i32
    %2 = arith.cmpi ne, %1, %c0_i32_0 : i32
    scf.if %2 {
      %cst_11 = arith.constant 0.000000e+00 : f32
      %17 = vector.broadcast %cst_11 : f32 to vector<8x128xf32>
      %c0_12 = arith.constant 0 : index
      %c0_13 = arith.constant 0 : index
      %18 = vector.load %arg8[%c0_12, %c0_13] : memref<8x128xf32, #tpu.memory_space<vmem>>, vector<8x128xf32>
      tpu.vector_store %arg8[%c0_12, %c0_13], %17 {strides = array<i32>} : memref<8x128xf32, #tpu.memory_space<vmem>>, vector<8x128xf32>,
    } else {
    }
    %c8_i32 = arith.constant 8 : i32
    %3 = arith.muli %arg2, %c8_i32 : i32
    %4 = tpu.assume_multiple %3, 8 : i32
    %c0 = arith.constant 0 : index
    %5 = arith.index_cast %4 : i32 to index
    %c0_1 = arith.constant 0 : index
    %6 = vector.load %arg4[%c0, %5, %c0_1] : memref<1x8x128xbf16, #tpu.memory_space<vmem>>, vector<1x8x128xbf16>
    %7 = vector.shape_cast %6 : vector<1x8x128xbf16> to vector<8x128xbf16>
    %c0_2 = arith.constant 0 : index
    %c0_3 = arith.constant 0 : index
    %8 = vector.load %arg8[%c0_2, %c0_3] : memref<8x128xf32, #tpu.memory_space<vmem>>, vector<8x128xf32>
    %c0_4 = arith.constant 0 : index
    %c0_5 = arith.constant 0 : index
    %c0_6 = arith.constant 0 : index
    %9 = vector.load %arg3[%c0_4, %c0_5, %c0_6] : memref<1x8x8xbf16, #tpu.memory_space<vmem>>, vector<1x8x8xbf16>
    %10 = vector.shape_cast %9 : vector<1x8x8xbf16> to vector<8x8xbf16>
    %cst = arith.constant dense<0.000000e+00> : vector<8x128xf32>
    %11 = tpu.matmul %10, %7, %cst {dimension_numbers = #tpu.dot_dimension_numbers<[1], [0], [0], [1], [0, 0, 1, 1], [], []>} : vector<8x8xbf16>, vector<8x128xbf16>, vector<8x128xf32> -> vector<8x128xf32>
    %12 = arith.addf %8, %11 : vector<8x128xf32>
    %c0_7 = arith.constant 0 : index
    %c0_8 = arith.constant 0 : index
    %13 = vector.load %arg8[%c0_7, %c0_8] : memref<8x128xf32, #tpu.memory_space<vmem>>, vector<8x128xf32>
    tpu.vector_store %arg8[%c0_7, %c0_8], %12 {strides = array<i32>} : memref<8x128xf32, #tpu.memory_space<vmem>>, vector<8x128xf32>,
    %c0_i32_9 = arith.constant 0 : i32
    %14 = arith.cmpi eq, %arg2, %c0_i32_9 : i32
    %15 = arith.extui %14 : i1 to i32
    %c0_i32_10 = arith.constant 0 : i32
    %16 = arith.cmpi ne, %15, %c0_i32_10 : i32
    scf.if %16 {
      %c0_11 = arith.constant 0 : index
      %c0_12 = arith.constant 0 : index
      %17 = vector.load %arg8[%c0_11, %c0_12] : memref<8x128xf32, #tpu.memory_space<vmem>>, vector<8x128xf32>
      %c0_13 = arith.constant 0 : index
      %c0_14 = arith.constant 0 : index
      %18 = vector.load %arg5[%c0_13, %c0_14] : memref<1x128xf32, #tpu.memory_space<vmem>>, vector<1x128xf32>
      %19 = vector.broadcast %18 : vector<1x128xf32> to vector<8x128xf32>
      %20 = arith.addf %17, %19 : vector<8x128xf32>
      %cst_15 = arith.constant 0.000000e+00 : f32
      %21 = vector.broadcast %cst_15 : f32 to vector<8x128xf32>
      %22 = arith.maximumf %20, %21 : vector<8x128xf32>
      %c0_16 = arith.constant 0 : index
      %c0_17 = arith.constant 0 : index
      %c0_18 = arith.constant 0 : index
      %23 = vector.load %arg6[%c0_16, %c0_17, %c0_18] : memref<1x8x128xf32, #tpu.memory_space<vmem>>, vector<1x8x128xf32>
      %24 = vector.shape_cast %23 : vector<1x8x128xf32> to vector<8x128xf32>
      %cst_19 = arith.constant 0.000000e+00 : f32
      %25 = vector.broadcast %cst_19 : f32 to vector<8x128xf32>
      %26 = arith.maximumf %24, %25 : vector<8x128xf32>
      %27 = tpu.iota {dimensions = array<i32: 1>} : vector<8x128xi32>
      %c11_i32 = arith.constant 11 : i32
      %28 = vector.broadcast %c11_i32 : i32 to vector<8x128xi32>
      %29 = arith.cmpi slt, %27, %28 : vector<8x128xi32>
      %30 = arith.select %29, %22, %26 : vector<8x128xi1>, vector<8x128xf32>
      %c0_20 = arith.constant 0 : index
      %c0_21 = arith.constant 0 : index
      %c0_22 = arith.constant 0 : index
      %31 = vector.load %arg7[%c0_20, %c0_21, %c0_22] : memref<1x8x128xf32, #tpu.memory_space<vmem>>, vector<1x8x128xf32>
      %32 = vector.shape_cast %31 : vector<1x8x128xf32> to vector<8x128xf32>
      %33 = vector.shape_cast %30 : vector<8x128xf32> to vector<1x8x128xf32>
      tpu.vector_store %arg7[%c0_20, %c0_21, %c0_22], %33 {strides = array<i32>} : memref<1x8x128xf32, #tpu.memory_space<vmem>>, vector<1x8x128xf32>,
    } else {
    }
    return
  }
  func.func @transform_0(%arg0: i32, %arg1: i32, %arg2: i32) -> (i32, i32, i32) {
    %c0_i32 = arith.constant 0 : i32
    return %arg0, %arg1, %arg2 : i32, i32, i32
  }
  func.func @transform_1(%arg0: i32, %arg1: i32, %arg2: i32) -> (i32, i32, i32) {
    %c0_i32 = arith.constant 0 : i32
    %c0_i32_0 = arith.constant 0 : i32
    %c0_i32_1 = arith.constant 0 : i32
    return %arg0, %c0_i32, %c0_i32_0 : i32, i32, i32
  }
  func.func @transform_2(%arg0: i32, %arg1: i32, %arg2: i32) -> (i32, i32) {
    %c0_i32 = arith.constant 0 : i32
    %c0_i32_0 = arith.constant 0 : i32
    %c0_i32_1 = arith.constant 0 : i32
    return %c0_i32, %c0_i32_0 : i32, i32
  }
  func.func @transform_3(%arg0: i32, %arg1: i32, %arg2: i32) -> (i32, i32, i32) {
    %c0_i32 = arith.constant 0 : i32
    %c0_i32_0 = arith.constant 0 : i32
    return %arg0, %arg1, %c0_i32 : i32, i32, i32
  }
  func.func @transform_4(%arg0: i32, %arg1: i32, %arg2: i32) -> (i32, i32, i32) {
    %c0_i32 = arith.constant 0 : i32
    %c0_i32_0 = arith.constant 0 : i32
    return %arg0, %arg1, %c0_i32 : i32, i32, i32
  }
}

</mosaic_0001>

<llo_original>
// kernel: tpu_custom_call.1
$region0: #{tpu_custom_call.1}
  #allocation0 [shape = 'u32[]', space=smem, size = 0x4, offset = 0x4, fixed_abs, tag = 'smem constant byte address 0x4 - core index']
  #allocation1 [shape = 'u32[144,128]{1,0:T(1,128)}', space=vmem, size = 0x12000, scoped, tag = 'internal scratch']
  #allocation2 [shape = 'f32[8,128]{1,0:T(8,128)}', space=vmem, size = 0x1000, scoped, tag = 'scratch operand']
  %s0 = inlined_call_operand.hbm [shape: bf16[2,8,8], index: 0, kind: input, shape index: {}]
  %s1 = inlined_call_operand.hbm [shape: bf16[2,8,128], index: 1, kind: input, shape index: {}]
  %s2 = inlined_call_operand.vmem [shape: f32[1,128], index: 2, kind: input, shape index: {}]
  %s3 = inlined_call_operand.hbm [shape: f32[2,8,128], index: 3, kind: input, shape index: {}]
  %s4 = inlined_call_operand.hbm [shape: f32[2,8,128], index: 4, kind: output, shape index: {}]
  %s5 = sld [smem:[#allocation0]]
  $region69: #{tpu_custom_call.1} parent=0
    _
  %s7 = ssub.s32 1, %s5
  %s8 = scalar_select 0, %s7, %s5
  $region1: #{tpu_custom_call.1} parent=0
    #allocation3 [shape = 'u8[4096]{0}', space=vmem, size = 0x1000, scoped, tag = 'input window, operand 0']
    #allocation4 [shape = 's32[2]{0}', space=sflag, size = 0x8, scoped, tag = 'scoped memory for tpu_custom_call.1']
    #allocation5 [shape = 's32[2]{0}', space=sflag, size = 0x8, scoped, tag = 'scoped memory for tpu_custom_call.1']
    #allocation6 [shape = 'u8[4096]{0}', space=vmem, size = 0x1000, scoped, tag = 'input window, operand 1']
    #allocation7 [shape = 's32[2]{0}', space=sflag, size = 0x8, scoped, tag = 'scoped memory for tpu_custom_call.1']
    #allocation8 [shape = 'u8[8192]{0}', space=vmem, size = 0x2000, scoped, tag = 'input window, operand 3']
    #allocation9 [shape = 'u8[8192]{0}', space=vmem, size = 0x2000, scoped, tag = 'output window, operand 0']
    %9 = vsyncpa [#allocation4], 0
    %s10 = scalar_lea.sflag [#allocation4], 1
    %11 = vsyncpa %s10, 0
    %12 = vsyncpa [#allocation7], 0
    %s13 = scalar_lea.sflag [#allocation7], 1
    %14 = vsyncpa %s13, 0
    %15 = vsyncpa [#allocation5], 0
    %s16 = scalar_lea.sflag [#allocation5], 1
    %17 = vsyncpa %s16, 0
    loop: start=0, step=1, limit=4
    $region2: #{tpu_custom_call.1} parent=1 // loop_pre_header
      _
    $region3: #{tpu_custom_call.1} parent=1 // loop_header
      %s19 = sphi 0, %s23
      %p20 = scmp.ge.s32.totalorder %s19, 4
      %s26 = sphi 0, %s45
      %s27 = sphi 0, %s41
      %s28 = sphi 0, %s37
      %s29 = sphi 0, %s26
      %s30 = sphi 0, %s27
      %s31 = sphi 0, %s28
      %s32 = sphi 0, %s29
      %s33 = sphi 0, %s30
      %s34 = sphi 0, %s31
      %s52 = sphi 0, %s54
      %s55 = sphi 0, %s52
      %s56 = sphi 0, %s55
      %s72 = sphi 0, %s56
      %s78 = sphi 0, %s80
      %s81 = sphi 0, %s78
      %s82 = sphi 0, %s81
      %s98 = sphi 0, %s82
      %s102 = sphi 0, %s102
      %s104 = sphi 0, %s102
      %s105 = sphi 0, %s104
      %s119 = sphi 0, %s105
      %s127 = sphi 0, %s129
      %s130 = sphi 0, %s127
      %s131 = sphi 0, %s130
      %s147 = sphi 0, %s131
      %s155 = sphi 0, %s157
      %s158 = sphi 0, %s155
      %s159 = sphi 0, %s158
      %s175 = sphi 0, %s159
    $region4: #{tpu_custom_call.1} parent=1 // loop_header_branch
      %22 = sbr.rel (%p20) target = $region8
    $region5: #{tpu_custom_call.1} parent=1 // loop_body
      %s24 = ssub.s32 %s19, 1
      %s25 = ssub.s32 %s19, 2
      %s35 = sadd.s32 1, %s28
      %p36 = scmp.ge.s32.totalorder %s35, 1
      %s37 = scalar_select %p36, 0, %s35
      %s38 = sadd.s32 1, %s27
      %s39 = scalar_select %p36, %s38, %s27
      %p40 = scmp.ge.s32.totalorder %s39, 1
      %s41 = scalar_select %p40, 0, %s39
      %s42 = sadd.s32 1, %s26
      %s43 = scalar_select %p40, %s42, %s26
      %p44 = scmp.ge.s32.totalorder %s43, 2
      %s45 = scalar_select %p44, 0, %s43
      %s46 = ssub.s32 %s26, %s45
      %s47 = ssub.s32 %s27, %s41
      %s48 = sor.u32 %s46, %s47
      %s49 = ssub.s32 %s28, %s37
      %s50 = sor.u32 %s48, %s49
      %p51 = scmp.eq.s32.totalorder %s50, 0
      %s53 = sadd.s32 %s52, 1
      %s54 = scalar_select %p51, %s52, %s53
      %p57 = pneg %p51
      %p58 = scmp.eq.s32.totalorder %s19, 1
      %p59 = por %p57, %p58
      %p60 = scmp.ne.s32.totalorder %s52, %s55
      %p61 = scmp.eq.s32.totalorder %s19, 0
      %p62 = por %p60, %p61
      %p63 = scmp.ne.s32.totalorder %s52, %s55
      %p64 = scmp.eq.s32.totalorder %s24, 1
      %p65 = por %p63, %p64
      %p66 = scmp.ne.s32.totalorder %s55, %s56
      %p67 = scmp.eq.s32.totalorder %s24, 0
      %p68 = por %p66, %p67
      %p69 = scmp.ne.s32.totalorder %s55, %s56
      %p70 = scmp.eq.s32.totalorder %s25, 1
      %p71 = por %p69, %p70
      %p73 = scmp.ne.s32.totalorder %s56, %s72
      %p74 = scmp.eq.s32.totalorder %s25, 0
      %p75 = por %p73, %p74
      %s76 = ssub.s32 %s26, %s45
      %p77 = scmp.eq.s32.totalorder %s76, 0
      %s79 = sadd.s32 %s78, 1
      %s80 = scalar_select %p77, %s78, %s79
      %p83 = pneg %p77
      %p84 = scmp.eq.s32.totalorder %s19, 1
      %p85 = por %p83, %p84
      %p86 = scmp.ne.s32.totalorder %s78, %s81
      %p87 = scmp.eq.s32.totalorder %s19, 0
      %p88 = por %p86, %p87
      %p89 = scmp.ne.s32.totalorder %s78, %s81
      %p90 = scmp.eq.s32.totalorder %s24, 1
      %p91 = por %p89, %p90
      %p92 = scmp.ne.s32.totalorder %s81, %s82
      %p93 = scmp.eq.s32.totalorder %s24, 0
      %p94 = por %p92, %p93
      %p95 = scmp.ne.s32.totalorder %s81, %s82
      %p96 = scmp.eq.s32.totalorder %s25, 1
      %p97 = por %p95, %p96
      %p99 = scmp.ne.s32.totalorder %s82, %s98
      %p100 = scmp.eq.s32.totalorder %s25, 0
      %p101 = por %p99, %p100
      %s103 = sadd.s32 %s102, 1
      %p106 = scmp.eq.s32.totalorder %s19, 1
      %p107 = scmp.ne.s32.totalorder %s102, %s104
      %p108 = scmp.eq.s32.totalorder %s19, 0
      %p109 = por %p107, %p108
      %p110 = scmp.ne.s32.totalorder %s102, %s104
      %p111 = scmp.eq.s32.totalorder %s24, 1
      %p112 = por %p110, %p111
      %p113 = scmp.ne.s32.totalorder %s104, %s105
      %p114 = scmp.eq.s32.totalorder %s24, 0
      %p115 = por %p113, %p114
      %p116 = scmp.ne.s32.totalorder %s104, %s105
      %p117 = scmp.eq.s32.totalorder %s25, 1
      %p118 = por %p116, %p117
      %p120 = scmp.ne.s32.totalorder %s105, %s119
      %p121 = scmp.eq.s32.totalorder %s25, 0
      %p122 = por %p120, %p121
      %s123 = ssub.s32 %s26, %s45
      %s124 = ssub.s32 %s27, %s41
      %s125 = sor.u32 %s123, %s124
      %p126 = scmp.eq.s32.totalorder %s125, 0
      %s128 = sadd.s32 %s127, 1
      %s129 = scalar_select %p126, %s127, %s128
      %p132 = pneg %p126
      %p133 = scmp.eq.s32.totalorder %s19, 1
      %p134 = por %p132, %p133
      %p135 = scmp.ne.s32.totalorder %s127, %s130
      %p136 = scmp.eq.s32.totalorder %s19, 0
      %p137 = por %p135, %p136
      %p138 = scmp.ne.s32.totalorder %s127, %s130
      %p139 = scmp.eq.s32.totalorder %s24, 1
      %p140 = por %p138, %p139
      %p141 = scmp.ne.s32.totalorder %s130, %s131
      %p142 = scmp.eq.s32.totalorder %s24, 0
      %p143 = por %p141, %p142
      %p144 = scmp.ne.s32.totalorder %s130, %s131
      %p145 = scmp.eq.s32.totalorder %s25, 1
      %p146 = por %p144, %p145
      %p148 = scmp.ne.s32.totalorder %s131, %s147
      %p149 = scmp.eq.s32.totalorder %s25, 0
      %p150 = por %p148, %p149
      %s151 = ssub.s32 %s26, %s45
      %s152 = ssub.s32 %s27, %s41
      %s153 = sor.u32 %s151, %s152
      %p154 = scmp.eq.s32.totalorder %s153, 0
      %s156 = sadd.s32 %s155, 1
      %s157 = scalar_select %p154, %s155, %s156
      %p160 = pneg %p154
      %p161 = scmp.eq.s32.totalorder %s19, 1
      %p162 = por %p160, %p161
      %p163 = scmp.ne.s32.totalorder %s155, %s158
      %p164 = scmp.eq.s32.totalorder %s19, 0
      %p165 = por %p163, %p164
      %p166 = scmp.ne.s32.totalorder %s155, %s158
      %p167 = scmp.eq.s32.totalorder %s24, 1
      %p168 = por %p166, %p167
      %p169 = scmp.ne.s32.totalorder %s158, %s159
      %p170 = scmp.eq.s32.totalorder %s24, 0
      %p171 = por %p169, %p170
      %p172 = scmp.ne.s32.totalorder %s158, %s159
      %p173 = scmp.eq.s32.totalorder %s25, 1
      %p174 = por %p172, %p173
      %p176 = scmp.ne.s32.totalorder %s159, %s175
      %p177 = scmp.eq.s32.totalorder %s25, 0
      %p178 = por %p176, %p177
      %p179 = scmp.le.s32.totalorder 1, %s19
      %p180 = scmp.lt.s32.totalorder %s19, 3
      %p181 = pnand %p179, %p180
      %p182 = pneg %p181
      // Predicated region
      $region9: #{tpu_custom_call.1} parent=5 // pred_check
        _
      $region10: #{tpu_custom_call.1} parent=5 // pred_check_branch
        %184 = sbr.rel (%p181) target = $region12
      $region11: #{tpu_custom_call.1} parent=5 // pred_region
        %s185 = ssub.s32 %s19, 1
        // Predicated region
        $region13: #{tpu_custom_call.1} parent=11 // pred_check
          %p186 = pneg %p115
        $region14: #{tpu_custom_call.1} parent=11 // pred_check_branch
          %188 = sbr.rel (%p186) target = $region16
        $region15: #{tpu_custom_call.1} parent=11 // pred_region
          _
        $region16: #{tpu_custom_call.1} parent=11 // pred_fallthru
          _
      $region12: #{tpu_custom_call.1} parent=5 // pred_fallthru
        _
      %p189 = scmp.lt.s32.totalorder %s19, 2
      // Predicated region
      $region17: #{tpu_custom_call.1} parent=5 // pred_check
        %p190 = pneg %p189
      $region18: #{tpu_custom_call.1} parent=5 // pred_check_branch
        %192 = sbr.rel (%p190) target = $region20
      $region19: #{tpu_custom_call.1} parent=5 // pred_region
        // Predicated region
        $region21: #{tpu_custom_call.1} parent=19 // pred_check
          %p193 = pneg %p62
        $region22: #{tpu_custom_call.1} parent=19 // pred_check_branch
          %195 = sbr.rel (%p193) target = $region24
        $region23: #{tpu_custom_call.1} parent=19 // pred_region
          %s196 = sand.u32 %s52, 1
          %s197 = scalar_lea.sflag [#allocation4], %s196
          %s198 = sand.u32 %s52, 1
          %s199 = smul.addr %s198, 4
          %s200 = scalar_lea.vmem [#allocation3], %s199
          %s202 = ssub.s32 64, 64
          %203 = vsyncadd %s197, %s202
          %s204 = sadd.s32 %s28, %s27
          %s205 = sadd.s32 %s204, %s26
          %s206 = smul.addr %s205, 64
          %s207 = scalar_lea.hbm %s0, %s206
          %s209 = sshll.u32 %s200, 4
          %s210 = int_to_ptr.vmem [resolvable:$true] %s209
          %212 = dma.hbm_to_vmem [thread:$0]  %s207, 64, %s210, %s197
        $region24: #{tpu_custom_call.1} parent=19 // pred_fallthru
          _
        // Predicated region
        $region25: #{tpu_custom_call.1} parent=19 // pred_check
          %p213 = pneg %p88
        $region26: #{tpu_custom_call.1} parent=19 // pred_check_branch
          %215 = sbr.rel (%p213) target = $region28
        $region27: #{tpu_custom_call.1} parent=19 // pred_region
          %s216 = sand.u32 %s19, 1
          %s217 = scalar_lea.sflag [#allocation7], %s216
          %s218 = sand.u32 %s78, 1
          %s219 = smul.addr %s218, 4
          %s220 = scalar_lea.vmem [#allocation6], %s219
          %s222 = ssub.s32 64, 64
          %223 = vsyncadd %s217, %s222
          %s224 = smul.addr %s26, 64
          %s225 = scalar_lea.hbm %s1, %s224
          %s227 = sshll.u32 %s220, 4
          %s228 = int_to_ptr.vmem [resolvable:$true] %s227
          %230 = dma.hbm_to_vmem [thread:$0]  %s225, 64, %s228, %s217
        $region28: #{tpu_custom_call.1} parent=19 // pred_fallthru
          _
        // Predicated region
        $region29: #{tpu_custom_call.1} parent=19 // pred_check
          %p231 = pneg %p137
        $region30: #{tpu_custom_call.1} parent=19 // pred_check_branch
          %233 = sbr.rel (%p231) target = $region32
        $region31: #{tpu_custom_call.1} parent=19 // pred_region
          %s234 = sand.u32 %s19, 1
          %s235 = scalar_lea.sflag [#allocation7], %s234
          %s236 = sand.u32 %s127, 1
          %s237 = smul.addr %s236, 8
          %s238 = scalar_lea.vmem [#allocation8], %s237
          %s240 = ssub.s32 128, 128
          %241 = vsyncadd %s235, %s240
          %s242 = sadd.s32 %s27, %s26
          %s243 = smul.addr %s242, 128
          %s244 = scalar_lea.hbm %s3, %s243
          %s246 = sshll.u32 %s238, 4
          %s247 = int_to_ptr.vmem [resolvable:$true] %s246
          %249 = dma.hbm_to_vmem [thread:$0]  %s244, 128, %s247, %s235
        $region32: #{tpu_custom_call.1} parent=19 // pred_fallthru
          _
      $region20: #{tpu_custom_call.1} parent=5 // pred_fallthru
        _
      %p250 = scmp.le.s32.totalorder 1, %s19
      %p251 = scmp.lt.s32.totalorder %s19, 3
      %p252 = pnand %p250, %p251
      %p253 = pneg %p252
      // Predicated region
      $region33: #{tpu_custom_call.1} parent=5 // pred_check
        _
      $region34: #{tpu_custom_call.1} parent=5 // pred_check_branch
        %255 = sbr.rel (%p252) target = $region36
      $region35: #{tpu_custom_call.1} parent=5 // pred_region
        %s256 = ssub.s32 %s19, 1
        %s257 = sand.u32 %s55, 1
        %s258 = scalar_lea.sflag [#allocation4], %s257
        %s259 = sand.u32 %s55, 1
        %s260 = smul.addr %s259, 4
        %s261 = scalar_lea.vmem [#allocation3], %s260
        // Predicated region
        $region37: #{tpu_custom_call.1} parent=35 // pred_check
          %p262 = pneg %p68
        $region38: #{tpu_custom_call.1} parent=35 // pred_check_branch
          %264 = sbr.rel (%p262) target = $region40
        $region39: #{tpu_custom_call.1} parent=35 // pred_region
          %265 = dma.done %s258, 64
        $region40: #{tpu_custom_call.1} parent=35 // pred_fallthru
          _
        %s266 = sand.u32 %s24, 1
        %s267 = scalar_lea.sflag [#allocation7], %s266
        %s268 = sand.u32 %s81, 1
        %s269 = smul.addr %s268, 4
        %s270 = scalar_lea.vmem [#allocation6], %s269
        // Predicated region
        $region41: #{tpu_custom_call.1} parent=35 // pred_check
          %p271 = pneg %p94
        $region42: #{tpu_custom_call.1} parent=35 // pred_check_branch
          %273 = sbr.rel (%p271) target = $region44
        $region43: #{tpu_custom_call.1} parent=35 // pred_region
          %274 = dma.done %s267, 64
        $region44: #{tpu_custom_call.1} parent=35 // pred_fallthru
          _
        %s275 = sand.u32 %s24, 1
        %s276 = scalar_lea.sflag [#allocation7], %s275
        %s277 = sand.u32 %s130, 1
        %s278 = smul.addr %s277, 8
        %s279 = scalar_lea.vmem [#allocation8], %s278
        // Predicated region
        $region45: #{tpu_custom_call.1} parent=35 // pred_check
          %p280 = pneg %p143
        $region46: #{tpu_custom_call.1} parent=35 // pred_check_branch
          %282 = sbr.rel (%p280) target = $region48
        $region47: #{tpu_custom_call.1} parent=35 // pred_region
          %283 = dma.done %s276, 128
        $region48: #{tpu_custom_call.1} parent=35 // pred_fallthru
          _
        %s284 = sand.u32 %s55, 1
        %s285 = scalar_lea.sflag [#allocation4], %s284
        %s286 = sand.u32 %s55, 1
        %s287 = smul.addr %s286, 4
        %s288 = scalar_lea.vmem [#allocation3], %s287
        %p289 = pneg %p68
        %p290 = pneg %p65
        %s291 = sand.u32 %s24, 1
        %s292 = scalar_lea.sflag [#allocation7], %s291
        %s293 = sand.u32 %s81, 1
        %s294 = smul.addr %s293, 4
        %s295 = scalar_lea.vmem [#allocation6], %s294
        %p296 = pneg %p94
        %p297 = pneg %p91
        %p298 = pneg %p115
        %p299 = pneg %p112
        %s300 = sand.u32 %s24, 1
        %s301 = scalar_lea.sflag [#allocation7], %s300
        %s302 = sand.u32 %s130, 1
        %s303 = smul.addr %s302, 8
        %s304 = scalar_lea.vmem [#allocation8], %s303
        %p305 = pneg %p143
        %p306 = pneg %p140
        %p307 = pneg %p171
        %p308 = pneg %p168
        %s309 = sand.u32 %s158, 1
        %s310 = scalar_lea.sflag [#allocation5], %s309
        %s311 = sand.u32 %s158, 1
        %s312 = smul.addr %s311, 8
        %s313 = scalar_lea.vmem [#allocation9], %s312
        %p315 = scmp.eq.s32.totalorder %s31, 0
        // Predicated region
        $region49: #{tpu_custom_call.1} parent=35 // pred_check
          %p316 = pneg %p315
        $region50: #{tpu_custom_call.1} parent=35 // pred_check_branch
          %318 = sbr.rel (%p316) target = $region52
        $region51: #{tpu_custom_call.1} parent=35 // pred_region
          %319 = vst [vmem:[#allocation2] sm:$0xff] 0.0
        $region52: #{tpu_custom_call.1} parent=35 // pred_fallthru
          _
        %s320 = smul.u32 %s31, 8
        %s321 = sshra.s32 %s320, 3
        %s322 = sand.u32 %s320, 7
        %s323 = smul.addr %s321, 4
        %s324 = scalar_lea.vmem %s270, %s323 [#allocation6]
        %v325 = vld [vmem:[%s324] sm:$0xf]
        %v326 = vld [vmem:[#allocation2] sm:$0xff]
        %v327 = vld [vmem:[%s261] sm:$0xf]
        %vm328 = vcmask 64512
        %v330 = vsel %vm328, %v327, 0
        %vm332 = vcmask 1043456
        %v334 = vsel %vm332, %v325, 0
        %336 = vmatprep.subr.bf16.mxu0 0
        %337 = vmatpush1.bf16.msra.mxu0 %v334
        %338 = vmatprep.subr.bf16.mxu0 0
        %339 = vmatpush1.bf16.msra.mxu0 0
        %340 = vmatprep.subr.bf16.mxu0 0
        %341 = vmatpush1.bf16.msra.mxu0 0
        %342 = vmatprep.subr.bf16.mxu0 0
        %343 = vmatpush1.bf16.msra.mxu0 0
        %344 = vmatprep.subr.bf16.mxu0 0
        %345 = vmatpush1.bf16.msra.mxu0 0
        %346 = vmatprep.subr.bf16.mxu0 0
        %347 = vmatpush1.bf16.msra.mxu0 0
        %348 = vmatprep.subr.bf16.mxu0 0
        %349 = vmatpush1.bf16.msra.mxu0 0
        %350 = vmatprep.subr.bf16.mxu0 0
        %351 = vmatpush1.bf16.msra.mxu0 0
        %352 = vmatprep.subr.bf16.mxu0 0
        %353 = vmatpush1.bf16.msra.mxu0 0
        %354 = vmatprep.subr.bf16.mxu0 0
        %355 = vmatpush1.bf16.msra.mxu0 0
        %356 = vmatprep.subr.bf16.mxu0 0
        %357 = vmatpush1.bf16.msra.mxu0 0
        %358 = vmatprep.subr.bf16.mxu0 0
        %359 = vmatpush1.bf16.msra.mxu0 0
        %360 = vmatprep.subr.bf16.mxu0 0
        %361 = vmatpush1.bf16.msra.mxu0 0
        %362 = vmatprep.subr.bf16.mxu0 0
        %363 = vmatpush1.bf16.msra.mxu0 0
        %364 = vmatprep.subr.bf16.mxu0 0
        %365 = vmatpush1.bf16.msra.mxu0 0
        %366 = vmatprep.subr.bf16.mxu0 0
        %367 = vmatpush1.bf16.msra.mxu0 0
        %368 = vmatprep.mubr.bf16.mxu0 0
        %369 = vmatmul.mubr.bf16.gmra.mrb[0].mxu0 %v330
        %v370 = vpop.f32.mrb[0].mxu0
        %v371 = vadd.f32 0.0, %v370
        %v372 = vpop.f32.mrb[0].mxu0
        %v373 = vpop.f32.mrb[0].mxu0
        %v374 = vpop.f32.mrb[0].mxu0
        %375 = vdwg.mxu0
        %v376 = vadd.f32 %v326, %v371
        %377 = vst [vmem:[#allocation2] sm:$0xff] %v376
        // Predicated region
        $region53: #{tpu_custom_call.1} parent=35 // pred_check
          %p378 = pneg %p315
        $region54: #{tpu_custom_call.1} parent=35 // pred_check_branch
          %380 = sbr.rel (%p378) target = $region56
        $region55: #{tpu_custom_call.1} parent=35 // pred_region
          %v381 = vld [vmem:[#allocation2] sm:$0xff]
          %v382 = vld [vmem:[%s2] sm:$0x1]
          %v384 = vlaneseq
          %v385 = vshrl.u32 %v384, 7
          %v386 = vsub.s32 0, %v385
          %v387 = vrot.slane %v382, %v386
          %v389 = vadd.f32 %v381, %v387
          %v390 = vmax.f32 %v389, 0.0
          %v391 = vld [vmem:[%s279] sm:$0xff]
          %v392 = vmax.f32 %v391, 0.0
          %v393 = vlaneseq
          %v394 = vand.u32 %v393, 127
          %vm395 = vcmp.lt.s32.totalorder %v394, 11
          %v396 = vsel %vm395, %v390, %v392
          %397 = vst [vmem:[%s313] sm:$0xff] %v396
        $region56: #{tpu_custom_call.1} parent=35 // pred_fallthru
          _
        %s398 = sand.u32 %s158, 1
        %s399 = scalar_lea.sflag [#allocation5], %s398
        %s400 = sand.u32 %s158, 1
        %s401 = smul.addr %s400, 8
        %s402 = scalar_lea.vmem [#allocation9], %s401
        // Predicated region
        $region57: #{tpu_custom_call.1} parent=35 // pred_check
          %p403 = pneg %p168
        $region58: #{tpu_custom_call.1} parent=35 // pred_check_branch
          %405 = sbr.rel (%p403) target = $region60
        $region59: #{tpu_custom_call.1} parent=35 // pred_region
          %s407 = ssub.s32 128, 128
          %408 = vsyncadd %s399, %s407
          %s409 = sadd.s32 %s30, %s29
          %s410 = smul.addr %s409, 128
          %s411 = scalar_lea.hbm %s4, %s410
          %s413 = sshll.u32 %s402, 4
          %s414 = int_to_ptr.vmem [resolvable:$true] %s413
          %416 = dma.vmem_to_hbm [thread:$0]  %s414, 128, %s411, %s399
        $region60: #{tpu_custom_call.1} parent=35 // pred_fallthru
          _
      $region36: #{tpu_custom_call.1} parent=5 // pred_fallthru
        _
      %p417 = scmp.le.s32.totalorder 2, %s19
      // Predicated region
      $region61: #{tpu_custom_call.1} parent=5 // pred_check
        %p418 = pneg %p417
      $region62: #{tpu_custom_call.1} parent=5 // pred_check_branch
        %420 = sbr.rel (%p418) target = $region64
      $region63: #{tpu_custom_call.1} parent=5 // pred_region
        %s421 = ssub.s32 %s19, 2
        // Predicated region
        $region65: #{tpu_custom_call.1} parent=63 // pred_check
          %p422 = pneg %p174
        $region66: #{tpu_custom_call.1} parent=63 // pred_check_branch
          %424 = sbr.rel (%p422) target = $region68
        $region67: #{tpu_custom_call.1} parent=63 // pred_region
          %s425 = sand.u32 %s159, 1
          %s426 = scalar_lea.sflag [#allocation5], %s425
          %s427 = sand.u32 %s159, 1
          %s428 = smul.addr %s427, 8
          %s429 = scalar_lea.vmem [#allocation9], %s428
          %430 = dma.done %s426, 128
        $region68: #{tpu_custom_call.1} parent=63 // pred_fallthru
          _
      $region64: #{tpu_custom_call.1} parent=5 // pred_fallthru
        _
    $region6: #{tpu_custom_call.1} parent=1 // loop_footer
      %s23 = sadd.s32 1, %s19
    $region7: #{tpu_custom_call.1} parent=1 // loop_footer_branch
      %18 = sbr.rel target = $region3
    $region8: #{tpu_custom_call.1} parent=1 // loop_exit
      _
    %431 = vsyncpa [#allocation4], 1
    %s432 = scalar_lea.sflag [#allocation4], 1
    %433 = vsyncpa %s432, 1
    %434 = vsyncpa [#allocation7], 1
    %s435 = scalar_lea.sflag [#allocation7], 1
    %436 = vsyncpa %s435, 1
    %437 = vsyncpa [#allocation5], 1
    %s438 = scalar_lea.sflag [#allocation5], 1
    %439 = vsyncpa %s438, 1

</llo_original>
